<compile_context>
chip_gen: v7x
topology: tpu7x:2x2x1
jax: 0.10.0
libtpu: 0.0.40
codegen_flags: <defaults>
</compile_context>

<pallas_src>
import jax
import jax.numpy as jnp
from jax.experimental import pallas as pl
from jax.experimental.pallas import tpu as pltpu

_LANES = 128


def _sa_kernel(vc_ref, x_ref, o_ref):
    # vc_ref: (C+1,) f32 in SMEM   -- collapsed weights v[0..C-1], bias c at [C]
    # x_ref : (C, TS, 128) f32 VMEM -- channel planes of one spatial tile
    # o_ref : (TS, 128)    f32 VMEM
    C = x_ref.shape[0]
    # Channel-by-channel scalar-splat MAC: pure VPU, no XLU reduce, no (C,TS,128)
    # product temporary (keeps vreg pressure low so tiles can be large).
    acc = x_ref[0] * vc_ref[0]
    for cc in range(1, C):
        acc = acc + x_ref[cc] * vc_ref[cc]
    acc = acc + vc_ref[C]
    o_ref[...] = jax.nn.sigmoid(acc).astype(o_ref.dtype)   # sigmoid -> EUP


def spatial_attention_v2(x_nchw, w1, b1, wout, bout, *, tile_rows=None):
    """x_nchw: (N, C, H, W) f32.  Returns (N, 1, H, W) f32.

    w1:   conv1 weight (C, C)  (out_ch, in_ch), b1: (C,)
    wout: out   weight (4C,),  bout: (1,)
    """
    N, C, H, W = x_nchw.shape
    HW = H * W

    # ---- algebraic collapse (exact up to f32 reassociation) ----
    w_sum = wout.reshape(4, C).sum(axis=0)                          # (C,)
    v = (w1.T @ w_sum).astype(jnp.float32)                          # (C,)
    c = (jnp.dot(b1, w_sum) + bout.reshape(())).astype(jnp.float32)
    vc = jnp.concatenate([v, c[None]])                              # (C+1,) -> SMEM

    # ---- lane-dense spatial view: HW -> (rows, 128), keep NCHW (free reshape) ----
    x3 = x_nchw.reshape(N, C, HW)
    hw_pad = pl.cdiv(HW, _LANES) * _LANES
    if hw_pad != HW:
        # TODO(synk): ragged fallback (HW not a multiple of 128) costs one extra
        # HBM pass for pad + crop; handle in-kernel with masked stores if this
        # path ever matters. Not hit by shapes whose H*W is a multiple of 128.
        x3 = jnp.pad(x3, ((0, 0), (0, 0), (0, hw_pad - HW)))
    n_rows = hw_pad // _LANES
    x4 = x3.reshape(N, C, n_rows, _LANES)

    # ---- tile sizing: ~4 MiB input blocks, 8-sublane aligned ----
    # Double-buffered (2*in + 2*out) stays < ~12 MiB => safe under v5e's 16 MiB
    # scoped-VMEM default and far under v6e/v7x limits.
    if tile_rows is None:
        target_block_bytes = 4 << 20
        row_bytes = C * _LANES * 4
        tile_rows = max(8, (target_block_bytes // row_bytes) // 8 * 8)
    if tile_rows >= n_rows:
        tile_rows = n_rows        # full extent -> any size is layout-legal
    n_tiles = pl.cdiv(n_rows, tile_rows)

    cost = pl.CostEstimate(
        flops=2 * N * HW * (C + 1),
        transcendentals=N * HW,
        bytes_accessed=N * C * hw_pad * 4 + N * hw_pad * 4 + (C + 1) * 4,
    )

    out3 = pl.pallas_call(
        _sa_kernel,
        out_shape=jax.ShapeDtypeStruct((N, n_rows, _LANES), jnp.float32),
        grid_spec=pltpu.PrefetchScalarGridSpec(
            num_scalar_prefetch=1,                 # vc -> SMEM
            grid=(N, n_tiles),
            in_specs=[
                pl.BlockSpec((pl.Squeezed(), C, tile_rows, _LANES),
                             lambda n, t, vc: (n, 0, t, 0)),
            ],
            out_specs=pl.BlockSpec((pl.Squeezed(), tile_rows, _LANES),
                                   lambda n, t, vc: (n, t, 0)),
        ),
        compiler_params=pltpu.CompilerParams(
            dimension_semantics=("parallel", "parallel"),   # v7x 2-TC sharding
            vmem_limit_bytes=32 << 20,
        ),
        cost_estimate=cost,
    )(vc, x4)

    if hw_pad == HW:
        return out3.reshape(N, 1, H, W)              # pure reshape, no copy
    return out3.reshape(N, 1, hw_pad)[:, :, :HW].reshape(N, 1, H, W)


def _reference(x_nchw, w1, b1, wout, bout):
    """Pure-JAX reference matching the PyTorch forward (un-collapsed)."""
    N, C, H, W = x_nchw.shape
    xr = jnp.transpose(x_nchw, (0, 2, 3, 1)).reshape(-1, C)
    y = xr @ w1.T + b1                                   # conv1 (1x1)
    ycat = jnp.concatenate([y, y, y, y], axis=-1)        # cat of 4 identical branches
    z = ycat @ wout.reshape(1, 4 * C).T + bout           # out (1x1)
    att = jax.nn.sigmoid(z)
    return jnp.transpose(att.reshape(N, H, W, 1), (0, 3, 1, 2))


if __name__ == "__main__":
    # Small shapes consistent with the module: channel=4, input (2, 4, 16, 16).
    N, C, H, W = 2, 4, 16, 16
    key = jax.random.PRNGKey(0)
    kx, kw1, kb1, kwo, kbo = jax.random.split(key, 5)

    x = jax.random.normal(kx, (N, C, H, W), dtype=jnp.float32)

    # conv1: Conv2d(C, C, 1) -> weight (C, C, 1, 1) flattened to (C, C), bias (C,)
    w1 = jax.random.normal(kw1, (C, C), dtype=jnp.float32) * 0.1
    b1 = jax.random.normal(kb1, (C,), dtype=jnp.float32) * 0.1
    # out: Conv2d(4C, 1, 1) -> weight (1, 4C, 1, 1) flattened to (4C,), bias (1,)
    wout = jax.random.normal(kwo, (4 * C,), dtype=jnp.float32) * 0.1
    bout = jax.random.normal(kbo, (1,), dtype=jnp.float32) * 0.1
    # TODO(synk): conv2/conv3/conv4 (3x3/5x5/7x7 branches) exist in __init__ but are
    # unused by the PyTorch forward, so they are intentionally not instantiated here.

    out = spatial_attention_v2(x, w1, b1, wout, bout)
    out = jax.block_until_ready(out)

    ref = _reference(x, w1, b1, wout, bout)
    assert out.shape == (N, 1, H, W)
    assert jnp.allclose(out, ref, atol=1e-5, rtol=1e-5), "mismatch vs reference"

    print("KERNEL_OK")
</pallas_src>

<mosaic_0001>
module attributes {stable_mosaic.version = 11 : i64} {
  func.func @_sa_kernel(%arg0: i32, %arg1: i32, %arg2: memref<5xf32, #tpu.memory_space<smem>>, %arg3: memref<1x4x2x128xf32, #tpu.memory_space<vmem>>, %arg4: memref<1x2x128xf32, #tpu.memory_space<vmem>>) attributes {dimension_semantics = [#tpu.dimension_semantics<parallel>, #tpu.dimension_semantics<parallel>], iteration_bounds = array<i64: 2, 1>, scalar_prefetch = 1 : i64, scratch_operands = 0 : i64, tpu.core_type = #tpu.core_type<tc>, window_params = [{transform_indices = @transform_0, window_bounds = array<i64: 1, 4, 2, 128>}, {transform_indices = @transform_1, window_bounds = array<i64: 1, 2, 128>}]} {
    %c0 = arith.constant 0 : index
    %c0_0 = arith.constant 0 : index
    %c0_1 = arith.constant 0 : index
    %c0_2 = arith.constant 0 : index
    %0 = vector.load %arg3[%c0, %c0_0, %c0_1, %c0_2] : memref<1x4x2x128xf32, #tpu.memory_space<vmem>>, vector<1x1x2x128xf32>
    %1 = vector.shape_cast %0 : vector<1x1x2x128xf32> to vector<2x128xf32>
    %c0_3 = arith.constant 0 : index
    %2 = memref.load %arg2[%c0_3] : memref<5xf32, #tpu.memory_space<smem>>
    %3 = vector.broadcast %2 : f32 to vector<2x128xf32>
    %4 = arith.mulf %1, %3 : vector<2x128xf32>
    %c0_4 = arith.constant 0 : index
    %c1 = arith.constant 1 : index
    %c0_5 = arith.constant 0 : index
    %c0_6 = arith.constant 0 : index
    %5 = vector.load %arg3[%c0_4, %c1, %c0_5, %c0_6] : memref<1x4x2x128xf32, #tpu.memory_space<vmem>>, vector<1x1x2x128xf32>
    %6 = vector.shape_cast %5 : vector<1x1x2x128xf32> to vector<2x128xf32>
    %c1_7 = arith.constant 1 : index
    %7 = memref.load %arg2[%c1_7] : memref<5xf32, #tpu.memory_space<smem>>
    %8 = vector.broadcast %7 : f32 to vector<2x128xf32>
    %9 = arith.mulf %6, %8 : vector<2x128xf32>
    %10 = arith.addf %4, %9 : vector<2x128xf32>
    %c0_8 = arith.constant 0 : index
    %c2 = arith.constant 2 : index
    %c0_9 = arith.constant 0 : index
    %c0_10 = arith.constant 0 : index
    %11 = vector.load %arg3[%c0_8, %c2, %c0_9, %c0_10] : memref<1x4x2x128xf32, #tpu.memory_space<vmem>>, vector<1x1x2x128xf32>
    %12 = vector.shape_cast %11 : vector<1x1x2x128xf32> to vector<2x128xf32>
    %c2_11 = arith.constant 2 : index
    %13 = memref.load %arg2[%c2_11] : memref<5xf32, #tpu.memory_space<smem>>
    %14 = vector.broadcast %13 : f32 to vector<2x128xf32>
    %15 = arith.mulf %12, %14 : vector<2x128xf32>
    %16 = arith.addf %10, %15 : vector<2x128xf32>
    %c0_12 = arith.constant 0 : index
    %c3 = arith.constant 3 : index
    %c0_13 = arith.constant 0 : index
    %c0_14 = arith.constant 0 : index
    %17 = vector.load %arg3[%c0_12, %c3, %c0_13, %c0_14] : memref<1x4x2x128xf32, #tpu.memory_space<vmem>>, vector<1x1x2x128xf32>
    %18 = vector.shape_cast %17 : vector<1x1x2x128xf32> to vector<2x128xf32>
    %c3_15 = arith.constant 3 : index
    %19 = memref.load %arg2[%c3_15] : memref<5xf32, #tpu.memory_space<smem>>
    %20 = vector.broadcast %19 : f32 to vector<2x128xf32>
    %21 = arith.mulf %18, %20 : vector<2x128xf32>
    %22 = arith.addf %16, %21 : vector<2x128xf32>
    %c4 = arith.constant 4 : index
    %23 = memref.load %arg2[%c4] : memref<5xf32, #tpu.memory_space<smem>>
    %24 = vector.broadcast %23 : f32 to vector<2x128xf32>
    %25 = arith.addf %22, %24 : vector<2x128xf32>
    %26 = arith.negf %25 : vector<2x128xf32>
    %27 = math.exp %26 : vector<2x128xf32>
    %cst = arith.constant 1.000000e+00 : f32
    %28 = vector.broadcast %cst : f32 to vector<2x128xf32>
    %29 = arith.addf %28, %27 : vector<2x128xf32>
    %30 = arith.divf %28, %29 : vector<2x128xf32>
    %c0_16 = arith.constant 0 : index
    %c0_17 = arith.constant 0 : index
    %c0_18 = arith.constant 0 : index
    %31 = vector.load %arg4[%c0_16, %c0_17, %c0_18] : memref<1x2x128xf32, #tpu.memory_space<vmem>>, vector<1x2x128xf32>
    %32 = vector.shape_cast %31 : vector<1x2x128xf32> to vector<2x128xf32>
    %33 = vector.shape_cast %30 : vector<2x128xf32> to vector<1x2x128xf32>
    tpu.vector_store %arg4[%c0_16, %c0_17, %c0_18], %33 {strides = array<i32>} : memref<1x2x128xf32, #tpu.memory_space<vmem>>, vector<1x2x128xf32>,
    return
  }
  func.func @transform_0(%arg0: i32, %arg1: i32, %arg2: memref<5xf32, #tpu.memory_space<smem>>) -> (i32, i32, i32, i32) {
    %c0_i32 = arith.constant 0 : i32
    %c0_i32_0 = arith.constant 0 : i32
    %c0_i32_1 = arith.constant 0 : i32
    return %arg0, %c0_i32, %arg1, %c0_i32_0 : i32, i32, i32, i32
  }
  func.func @transform_1(%arg0: i32, %arg1: i32, %arg2: memref<5xf32, #tpu.memory_space<smem>>) -> (i32, i32, i32) {
    %c0_i32 = arith.constant 0 : i32
    %c0_i32_0 = arith.constant 0 : i32
    return %arg0, %arg1, %c0_i32 : i32, i32, i32
  }
}

</mosaic_0001>

<llo_original>
// kernel: tpu_custom_call.1
$region0: #{tpu_custom_call.1}
  #allocation0 [shape = 'u32[]', space=smem, size = 0x4, offset = 0x4, fixed_abs, tag = 'smem constant byte address 0x4 - core index']
  #allocation1 [shape = 'u32[144,128]{1,0:T(1,128)}', space=vmem, size = 0x12000, scoped, tag = 'internal scratch']
  #allocation2 [shape = 's32[1]{0}', space=sflag, size = 0x4, scoped, tag = 'scoped memory for tpu_custom_call.1']
  #allocation3 [shape = 'u8[512]{0}', space=smem, size = 0x200, scoped, tag = 'prefetched SMEM operand 0']
  %s0 = inlined_call_operand.hbm [shape: f32[5], index: 0, kind: input, shape index: {}]
  %s1 = inlined_call_operand.hbm [shape: f32[2,4,2,128], index: 1, kind: input, shape index: {}]
  %s2 = inlined_call_operand.hbm [shape: f32[2,2,128], index: 2, kind: output, shape index: {}]
  %s3 = sld [smem:[#allocation0]]
  $region41: #{tpu_custom_call.1} parent=0
    _
  %s5 = ssub.s32 1, %s3
  %s6 = scalar_select 0, %s5, %s3
  %8 = dma.hbm_to_smem %s0, 16, [#allocation3], [#allocation2]
  %9 = dma.done [#allocation2], 16
  %10 = sfence
  $region1: #{tpu_custom_call.1} parent=0
    #allocation4 [shape = 'u8[8192]{0}', space=vmem, size = 0x2000, scoped, tag = 'input window, operand 1']
    #allocation5 [shape = 's32[2]{0}', space=sflag, size = 0x8, scoped, tag = 'scoped memory for tpu_custom_call.1']
    #allocation6 [shape = 's32[2]{0}', space=sflag, size = 0x8, scoped, tag = 'scoped memory for tpu_custom_call.1']
    #allocation7 [shape = 'u8[2048]{0}', space=vmem, size = 0x800, scoped, tag = 'output window, operand 0']
    %11 = vsyncpa [#allocation5], 0
    %s12 = scalar_lea.sflag [#allocation5], 1
    %13 = vsyncpa %s12, 0
    %14 = vsyncpa [#allocation6], 0
    %s15 = scalar_lea.sflag [#allocation6], 1
    %16 = vsyncpa %s15, 0
    loop: start=0, step=1, limit=4
    $region2: #{tpu_custom_call.1} parent=1 // loop_pre_header
      _
    $region3: #{tpu_custom_call.1} parent=1 // loop_header
      %s18 = sphi 0, %s22
      %p19 = scmp.ge.s32.totalorder %s18, 4
      %s25 = sphi 0, %s37
      %s26 = sphi 0, %s33
      %s27 = sphi 0, %s25
      %s28 = sphi 0, %s26
      %s29 = sphi 0, %s27
      %s30 = sphi 0, %s28
      %s42 = sphi 0, %s44
      %s45 = sphi 0, %s42
      %s46 = sphi 0, %s45
      %s62 = sphi 0, %s46
      %s70 = sphi 0, %s72
      %s73 = sphi 0, %s70
      %s74 = sphi 0, %s73
      %s90 = sphi 0, %s74
    $region4: #{tpu_custom_call.1} parent=1 // loop_header_branch
      %21 = sbr.rel (%p19) target = $region8
    $region5: #{tpu_custom_call.1} parent=1 // loop_body
      %s23 = ssub.s32 %s18, 1
      %s24 = ssub.s32 %s18, 2
      %s31 = sadd.s32 1, %s26
      %p32 = scmp.ge.s32.totalorder %s31, 1
      %s33 = scalar_select %p32, 0, %s31
      %s34 = sadd.s32 1, %s25
      %s35 = scalar_select %p32, %s34, %s25
      %p36 = scmp.ge.s32.totalorder %s35, 2
      %s37 = scalar_select %p36, 0, %s35
      %s38 = ssub.s32 %s25, %s37
      %s39 = ssub.s32 %s26, %s33
      %s40 = sor.u32 %s38, %s39
      %p41 = scmp.eq.s32.totalorder %s40, 0
      %s43 = sadd.s32 %s42, 1
      %s44 = scalar_select %p41, %s42, %s43
      %p47 = pneg %p41
      %p48 = scmp.eq.s32.totalorder %s18, 1
      %p49 = por %p47, %p48
      %p50 = scmp.ne.s32.totalorder %s42, %s45
      %p51 = scmp.eq.s32.totalorder %s18, 0
      %p52 = por %p50, %p51
      %p53 = scmp.ne.s32.totalorder %s42, %s45
      %p54 = scmp.eq.s32.totalorder %s23, 1
      %p55 = por %p53, %p54
      %p56 = scmp.ne.s32.totalorder %s45, %s46
      %p57 = scmp.eq.s32.totalorder %s23, 0
      %p58 = por %p56, %p57
      %p59 = scmp.ne.s32.totalorder %s45, %s46
      %p60 = scmp.eq.s32.totalorder %s24, 1
      %p61 = por %p59, %p60
      %p63 = scmp.ne.s32.totalorder %s46, %s62
      %p64 = scmp.eq.s32.totalorder %s24, 0
      %p65 = por %p63, %p64
      %s66 = ssub.s32 %s25, %s37
      %s67 = ssub.s32 %s26, %s33
      %s68 = sor.u32 %s66, %s67
      %p69 = scmp.eq.s32.totalorder %s68, 0
      %s71 = sadd.s32 %s70, 1
      %s72 = scalar_select %p69, %s70, %s71
      %p75 = pneg %p69
      %p76 = scmp.eq.s32.totalorder %s18, 1
      %p77 = por %p75, %p76
      %p78 = scmp.ne.s32.totalorder %s70, %s73
      %p79 = scmp.eq.s32.totalorder %s18, 0
      %p80 = por %p78, %p79
      %p81 = scmp.ne.s32.totalorder %s70, %s73
      %p82 = scmp.eq.s32.totalorder %s23, 1
      %p83 = por %p81, %p82
      %p84 = scmp.ne.s32.totalorder %s73, %s74
      %p85 = scmp.eq.s32.totalorder %s23, 0
      %p86 = por %p84, %p85
      %p87 = scmp.ne.s32.totalorder %s73, %s74
      %p88 = scmp.eq.s32.totalorder %s24, 1
      %p89 = por %p87, %p88
      %p91 = scmp.ne.s32.totalorder %s74, %s90
      %p92 = scmp.eq.s32.totalorder %s24, 0
      %p93 = por %p91, %p92
      %p94 = scmp.le.s32.totalorder 1, %s18
      %p95 = scmp.lt.s32.totalorder %s18, 3
      %p96 = pnand %p94, %p95
      %p97 = pneg %p96
      // Predicated region
      $region9: #{tpu_custom_call.1} parent=5 // pred_check
        _
      $region10: #{tpu_custom_call.1} parent=5 // pred_check_branch
        %99 = sbr.rel (%p96) target = $region12
      $region11: #{tpu_custom_call.1} parent=5 // pred_region
        %s100 = ssub.s32 %s18, 1
      $region12: #{tpu_custom_call.1} parent=5 // pred_fallthru
        _
      %p101 = scmp.lt.s32.totalorder %s18, 2
      // Predicated region
      $region13: #{tpu_custom_call.1} parent=5 // pred_check
        %p102 = pneg %p101
      $region14: #{tpu_custom_call.1} parent=5 // pred_check_branch
        %104 = sbr.rel (%p102) target = $region16
      $region15: #{tpu_custom_call.1} parent=5 // pred_region
        // Predicated region
        $region17: #{tpu_custom_call.1} parent=15 // pred_check
          %p105 = pneg %p52
        $region18: #{tpu_custom_call.1} parent=15 // pred_check_branch
          %107 = sbr.rel (%p105) target = $region20
        $region19: #{tpu_custom_call.1} parent=15 // pred_region
          %s108 = sand.u32 %s42, 1
          %s109 = scalar_lea.sflag [#allocation5], %s108
          %s110 = sand.u32 %s42, 1
          %s111 = smul.addr %s110, 8
          %s112 = scalar_lea.vmem [#allocation4], %s111
          %s114 = ssub.s32 128, 128
          %115 = vsyncadd %s109, %s114
          %s116 = smul.addr %s25, 4
          %s117 = sadd.s32 %s26, %s116
          %s118 = smul.addr %s117, 32
          %s119 = scalar_lea.hbm %s1, %s118
          %s120 = sshll.u32 %s112, 4
          %s121 = int_to_ptr.vmem [resolvable:$true] %s120
          %126 = dma.hbm_to_vmem [thread:$0]  %s119, 128, %s121, %s109, 32, 32, 2
        $region20: #{tpu_custom_call.1} parent=15 // pred_fallthru
          _
      $region16: #{tpu_custom_call.1} parent=5 // pred_fallthru
        _
      %p127 = scmp.le.s32.totalorder 1, %s18
      %p128 = scmp.lt.s32.totalorder %s18, 3
      %p129 = pnand %p127, %p128
      %p130 = pneg %p129
      // Predicated region
      $region21: #{tpu_custom_call.1} parent=5 // pred_check
        _
      $region22: #{tpu_custom_call.1} parent=5 // pred_check_branch
        %132 = sbr.rel (%p129) target = $region24
      $region23: #{tpu_custom_call.1} parent=5 // pred_region
        %s133 = ssub.s32 %s18, 1
        %s134 = sand.u32 %s45, 1
        %s135 = scalar_lea.sflag [#allocation5], %s134
        %s136 = sand.u32 %s45, 1
        %s137 = smul.addr %s136, 8
        %s138 = scalar_lea.vmem [#allocation4], %s137
        // Predicated region
        $region25: #{tpu_custom_call.1} parent=23 // pred_check
          %p139 = pneg %p58
        $region26: #{tpu_custom_call.1} parent=23 // pred_check_branch
          %141 = sbr.rel (%p139) target = $region28
        $region27: #{tpu_custom_call.1} parent=23 // pred_region
          %142 = dma.done %s135, 128
        $region28: #{tpu_custom_call.1} parent=23 // pred_fallthru
          _
        %s143 = sand.u32 %s45, 1
        %s144 = scalar_lea.sflag [#allocation5], %s143
        %s145 = sand.u32 %s45, 1
        %s146 = smul.addr %s145, 8
        %s147 = scalar_lea.vmem [#allocation4], %s146
        %p148 = pneg %p58
        %p149 = pneg %p55
        %p150 = pneg %p86
        %p151 = pneg %p83
        %s152 = sand.u32 %s73, 1
        %s153 = scalar_lea.sflag [#allocation6], %s152
        %s154 = sand.u32 %s73, 1
        %s155 = smul.addr %s154, 2
        %s156 = scalar_lea.vmem [#allocation7], %s155
        %v157 = vld [vmem:[%s138] sm:$0x3]
        %s158 = sld [smem:[#allocation3]]
        %v159 = vstv %s158
        %v160 = vmul.f32 %v157, %v159
        %s161 = scalar_lea.vmem %s138, 2 [#allocation4]
        %v162 = vld [vmem:[%s161] sm:$0x3]
        %s163 = sld [smem:[#allocation3 + $0x1]]
        %v164 = vstv %s163
        %v165 = vmul.f32 %v162, %v164
        %v166 = vadd.f32 %v160, %v165
        %s167 = scalar_lea.vmem %s138, 4 [#allocation4]
        %v168 = vld [vmem:[%s167] sm:$0x3]
        %s169 = sld [smem:[#allocation3 + $0x2]]
        %v170 = vstv %s169
        %v171 = vmul.f32 %v168, %v170
        %v172 = vadd.f32 %v166, %v171
        %s173 = scalar_lea.vmem %s138, 6 [#allocation4]
        %v174 = vld [vmem:[%s173] sm:$0x3]
        %s175 = sld [smem:[#allocation3 + $0x3]]
        %v176 = vstv %s175
        %v177 = vmul.f32 %v174, %v176
        %v178 = vadd.f32 %v172, %v177
        %s179 = sld [smem:[#allocation3 + $0x4]]
        %v180 = vstv %s179
        %v181 = vadd.f32 %v178, %v180
        %v182 = vxor.u32 %v181, 2147483648
        %v183 = vmul.f32 %v182, 1.442695
        %v184 = vpow.pop %v183
        %v185 = vadd.f32 %v184, 1.0
        %v186 = vrcp.pop %v185
        %v187 = vmul.f32 1.0, %v186
        %188 = vst [vmem:[%s156] sm:$0x3] %v187
        %s189 = sand.u32 %s73, 1
        %s190 = scalar_lea.sflag [#allocation6], %s189
        %s191 = sand.u32 %s73, 1
        %s192 = smul.addr %s191, 2
        %s193 = scalar_lea.vmem [#allocation7], %s192
        // Predicated region
        $region29: #{tpu_custom_call.1} parent=23 // pred_check
          %p194 = pneg %p83
        $region30: #{tpu_custom_call.1} parent=23 // pred_check_branch
          %196 = sbr.rel (%p194) target = $region32
        $region31: #{tpu_custom_call.1} parent=23 // pred_region
          %s198 = ssub.s32 32, 32
          %199 = vsyncadd %s190, %s198
          %s200 = sadd.s32 %s28, %s27
          %s201 = smul.addr %s200, 32
          %s202 = scalar_lea.hbm %s2, %s201
          %s204 = sshll.u32 %s193, 4
          %s205 = int_to_ptr.vmem [resolvable:$true] %s204
          %207 = dma.vmem_to_hbm [thread:$0]  %s205, 32, %s202, %s190
        $region32: #{tpu_custom_call.1} parent=23 // pred_fallthru
          _
      $region24: #{tpu_custom_call.1} parent=5 // pred_fallthru
        _
      %p208 = scmp.le.s32.totalorder 2, %s18
      // Predicated region
      $region33: #{tpu_custom_call.1} parent=5 // pred_check
        %p209 = pneg %p208
      $region34: #{tpu_custom_call.1} parent=5 // pred_check_branch
        %211 = sbr.rel (%p209) target = $region36
      $region35: #{tpu_custom_call.1} parent=5 // pred_region
        %s212 = ssub.s32 %s18, 2
        // Predicated region
        $region37: #{tpu_custom_call.1} parent=35 // pred_check
          %p213 = pneg %p89
        $region38: #{tpu_custom_call.1} parent=35 // pred_check_branch
          %215 = sbr.rel (%p213) target = $region40
        $region39: #{tpu_custom_call.1} parent=35 // pred_region
          %s216 = sand.u32 %s74, 1
          %s217 = scalar_lea.sflag [#allocation6], %s216
          %s218 = sand.u32 %s74, 1
          %s219 = smul.addr %s218, 2
          %s220 = scalar_lea.vmem [#allocation7], %s219
          %221 = dma.done %s217, 32
        $region40: #{tpu_custom_call.1} parent=35 // pred_fallthru
          _
      $region36: #{tpu_custom_call.1} parent=5 // pred_fallthru
        _
    $region6: #{tpu_custom_call.1} parent=1 // loop_footer
      %s22 = sadd.s32 1, %s18
    $region7: #{tpu_custom_call.1} parent=1 // loop_footer_branch
      %17 = sbr.rel target = $region3
    $region8: #{tpu_custom_call.1} parent=1 // loop_exit
      _
    %222 = vsyncpa [#allocation5], 1
    %s223 = scalar_lea.sflag [#allocation5], 1
    %224 = vsyncpa %s223, 1
    %225 = vsyncpa [#allocation6], 1
    %s226 = scalar_lea.sflag [#allocation6], 1
    %227 = vsyncpa %s226, 1

</llo_original>
